<compile_context>
chip_gen: v7x
topology: tpu7x:2x2x1
jax: 0.10.0
libtpu: 0.0.40
codegen_flags: <defaults>
</compile_context>

<pallas_src>
import functools

import jax
import jax.numpy as jnp
from jax.experimental import pallas as pl
from jax.experimental.pallas import tpu as pltpu


DILATIONS = (1, 3, 5)


# ----------------------------------------------------------------------------
# Fused Pallas kernel (one batch element per grid step)
# ----------------------------------------------------------------------------
def _fem_fused_kernel(x_ref, wb_ref, wf_ref, bb_ref, bf_ref, o_ref,
                      *, Wp, L, Cin, pad, dilations):
    """Fused FeatureEnhanceModule forward.

    Layouts (channels-first, spatial flattened onto the lane axis):
      x_ref  : (1, Cin, Lpad)        shared max-dilation zero-padded input (bf16),
                                     flat index = row*Wp + col in padded coords
      wb_ref : (3*Cin, 27*Cin)       block-diag branch weights, BN scale folded (bf16)
      wf_ref : (Cout, 3*Cin)         fusion 1x1 weight, sf folded, transposed (bf16)
      bb_ref : (3*Cin, 1)            branch BN biases (f32)
      bf_ref : (Cout, 1)             fusion BN bias (f32)
      o_ref  : (1, Cout, L)          lane-dense output; wrapper strips cols >= W
    """
    # Tap-stacked slab (27*Cin, L): one shifted lane-dense view per (branch,ky,kx).
    pieces = []
    for d in dilations:
        off = pad - d                              # branch offset into shared padding
        for ky in range(3):
            for kx in range(3):
                base = (off + ky * d) * Wp + (off + kx * d)   # static flat tap offset
                # Upcast so the 4-sublane-granular concat stays on the 32-bit path
                # (values are exactly representable; downcast below is exact).
                pieces.append(x_ref[0, :, base:base + L].astype(jnp.float32))
    slab = jnp.concatenate(pieces, axis=0).astype(jnp.bfloat16)        # (27*Cin, L)

    # All three dilated 3x3 convs in ONE large-K MXU matmul (K = 27*Cin).
    acc = jnp.dot(wb_ref[...], slab, preferred_element_type=jnp.float32)  # (3*Cin, L) f32
    y = jnp.maximum(acc + bb_ref[...], 0.0)        # bias + ReLU (f32 epilogue)

    # concat(y1,y2,y3) is implicit in the row order of y; ONE fusion matmul.
    out = jnp.dot(wf_ref[...], y.astype(jnp.bfloat16),
                  preferred_element_type=jnp.float32)                    # (Cout, L) f32
    out = jnp.maximum(out + bf_ref[...], 0.0)
    o_ref[0] = out.astype(o_ref.dtype)             # unmasked lane-dense store (L % 128 == 0)


# ----------------------------------------------------------------------------
# Wrapper: layout plumbing (pad once, flatten, fold BN, transpose/stack weights)
# ----------------------------------------------------------------------------
def feature_enhance_forward(x, params, dilations=DILATIONS):
    """x: NCHW (N, Cin, H, W) float32.  Returns NCHW (N, Cout, H, W)."""
    N, Cin, H, W = x.shape
    Cout = params["wf"].shape[-1]
    B = len(dilations)
    pad = max(dilations)
    Hp, Wp = H + 2 * pad, W + 2 * pad
    HWp = H * Wp
    L = ((HWp + 127) // 128) * 128                 # lane-dense matmul-N / store width
    Lpad = 2 * pad * Wp + 2 * pad + L              # covers every shifted [base, base+L)
    tail = Lpad - Hp * Wp

    # One shared max-dilation padding, flatten spatial onto the lane axis, bf16.
    xp = jnp.pad(x, ((0, 0), (0, 0), (pad, pad), (pad, pad)))
    xf = jnp.pad(xp.reshape(N, Cin, Hp * Wp), ((0, 0), (0, 0), (0, tail)))
    xf = xf.astype(jnp.bfloat16)

    # Fold BN scales into the conv weights (exact; applied before the ReLUs).
    blocks, biases = [], []
    for i in range(B):
        w = params[f"w{i + 1}"] * params[f"s{i + 1}"][None, None, None, :]   # HWIO * s_out
        # (ky,kx,ci,co) -> (co, (ky*3+kx)*Cin + ci), matching the slab row order.
        blocks.append(jnp.transpose(w, (3, 0, 1, 2)).reshape(Cin, 9 * Cin))
        biases.append(params[f"b{i + 1}"])
    wb = jax.scipy.linalg.block_diag(*blocks).astype(jnp.bfloat16)       # (3*Cin, 27*Cin)
    bb = jnp.concatenate(biases).reshape(B * Cin, 1).astype(jnp.float32)  # (3*Cin, 1)
    wf = (params["wf"] * params["sf"][None, :]).T.astype(jnp.bfloat16)    # (Cout, 3*Cin)
    bf = params["bf"].reshape(Cout, 1).astype(jnp.float32)                # (Cout, 1)

    kernel = functools.partial(_fem_fused_kernel, Wp=Wp, L=L, Cin=Cin,
                               pad=pad, dilations=dilations)

    out_flat = pl.pallas_call(
        kernel,
        out_shape=jax.ShapeDtypeStruct((N, Cout, L), x.dtype),
        grid=(N,),
        in_specs=[
            pl.BlockSpec((1, Cin, Lpad), lambda n: (n, 0, 0)),
            pl.BlockSpec((B * Cin, 9 * B * Cin), lambda n: (0, 0)),   # VMEM-resident
            pl.BlockSpec((Cout, B * Cin), lambda n: (0, 0)),
            pl.BlockSpec((B * Cin, 1), lambda n: (0, 0)),
            pl.BlockSpec((Cout, 1), lambda n: (0, 0)),
        ],
        out_specs=pl.BlockSpec((1, Cout, L), lambda n: (n, 0, 0)),
        compiler_params=pltpu.CompilerParams(
            dimension_semantics=("parallel",),
            vmem_limit_bytes=48 * 1024 * 1024),
    )(xf, wb, wf, bb, bf)

    # Un-flatten in the wrapper and drop the padded columns / lane tail.
    # TODO(synk): let the consumer accept the padded layout to avoid this copy.
    return out_flat[:, :, :HWp].reshape(N, Cout, H, Wp)[:, :, :, :W]


# ----------------------------------------------------------------------------
# Deterministic parameter construction (synthetic; BN folded to scale/bias)
# ----------------------------------------------------------------------------
def make_params(key, in_channels, out_channels):
    def bn_fold(k, c):
        kg, kb, km, kv = jax.random.split(k, 4)
        gamma = jax.random.uniform(kg, (c,), jnp.float32, 0.5, 1.5)
        beta = 0.1 * jax.random.normal(kb, (c,), jnp.float32)
        mean = 0.1 * jax.random.normal(km, (c,), jnp.float32)
        var = jax.random.uniform(kv, (c,), jnp.float32, 0.5, 1.5)
        scale = gamma / jnp.sqrt(var + 1e-5)
        bias = beta - mean * scale
        return scale, bias

    ks = jax.random.split(key, 8)
    p = {}
    p["w1"] = 0.2 * jax.random.normal(ks[0], (3, 3, in_channels, in_channels), jnp.float32)
    p["w2"] = 0.2 * jax.random.normal(ks[1], (3, 3, in_channels, in_channels), jnp.float32)
    p["w3"] = 0.2 * jax.random.normal(ks[2], (3, 3, in_channels, in_channels), jnp.float32)
    p["wf"] = 0.2 * jax.random.normal(ks[3], (3 * in_channels, out_channels), jnp.float32)
    p["s1"], p["b1"] = bn_fold(ks[4], in_channels)
    p["s2"], p["b2"] = bn_fold(ks[5], in_channels)
    p["s3"], p["b3"] = bn_fold(ks[6], in_channels)
    p["sf"], p["bf"] = bn_fold(ks[7], out_channels)
    return p


# ----------------------------------------------------------------------------
# Pure-JAX reference (for correctness check), NCHW like the PyTorch module
# ----------------------------------------------------------------------------
def _ref_conv_bn_relu(x, w, scale, bias, dilation):
    y = jax.lax.conv_general_dilated(
        x, w, window_strides=(1, 1),
        padding=[(dilation, dilation), (dilation, dilation)],
        rhs_dilation=(dilation, dilation),
        dimension_numbers=("NCHW", "HWIO", "NCHW"))
    return jnp.maximum(y * scale[None, :, None, None] + bias[None, :, None, None], 0.0)


def feature_enhance_ref(x, params):
    y1 = _ref_conv_bn_relu(x, params["w1"], params["s1"], params["b1"], 1)
    y2 = _ref_conv_bn_relu(x, params["w2"], params["s2"], params["b2"], 3)
    y3 = _ref_conv_bn_relu(x, params["w3"], params["s3"], params["b3"], 5)
    cat = jnp.concatenate([y1, y2, y3], axis=1)
    wf = params["wf"].reshape(1, 1, *params["wf"].shape)     # (1,1,3*Cin,Cout) HWIO
    y = jax.lax.conv_general_dilated(
        cat, wf, window_strides=(1, 1), padding=[(0, 0), (0, 0)],
        dimension_numbers=("NCHW", "HWIO", "NCHW"))
    return jnp.maximum(y * params["sf"][None, :, None, None]
                       + params["bf"][None, :, None, None], 0.0)


# ----------------------------------------------------------------------------
if __name__ == "__main__":
    N, C_in, H, W = 2, 4, 16, 16      # NCHW, matches the PyTorch module input
    C_out = 8

    key = jax.random.PRNGKey(0)
    kx_, kp = jax.random.split(key)
    x = jax.random.normal(kx_, (N, C_in, H, W), jnp.float32)
    params = make_params(kp, C_in, C_out)

    out = jax.jit(feature_enhance_forward)(x, params)
    out = jax.block_until_ready(out)

    ref = jax.block_until_ready(feature_enhance_ref(x, params))
    assert out.shape == (N, C_out, H, W), out.shape
    err = float(jnp.max(jnp.abs(out - ref)))
    # bf16 MXU inputs with f32 accumulation: ~5e-3 absolute error expected here.
    assert jnp.allclose(out, ref, rtol=2e-2, atol=2e-2), err

    print("KERNEL_OK")
</pallas_src>

<mosaic_0001>
module attributes {stable_mosaic.version = 11 : i64} {
  func.func @_fem_fused_kernel(%arg0: i32, %arg1: memref<1x4x782xbf16, #tpu.memory_space<vmem>>, %arg2: memref<12x108xbf16, #tpu.memory_space<vmem>>, %arg3: memref<8x12xbf16, #tpu.memory_space<vmem>>, %arg4: memref<12x1xf32, #tpu.memory_space<vmem>>, %arg5: memref<8x1xf32, #tpu.memory_space<vmem>>, %arg6: memref<1x8x512xf32, #tpu.memory_space<vmem>>) attributes {dimension_semantics = [#tpu.dimension_semantics<parallel>], iteration_bounds = array<i64: 2>, scalar_prefetch = 0 : i64, scratch_operands = 0 : i64, tpu.core_type = #tpu.core_type<tc>, window_params = [{transform_indices = @transform_0, window_bounds = array<i64: 1, 4, 782>}, {pipeline_mode = #tpu.pipeline_mode<synchronous>, transform_indices = @transform_1, window_bounds = array<i64: 12, 108>}, {pipeline_mode = #tpu.pipeline_mode<synchronous>, transform_indices = @transform_2, window_bounds = array<i64: 8, 12>}, {pipeline_mode = #tpu.pipeline_mode<synchronous>, transform_indices = @transform_3, window_bounds = array<i64: 12, 1>}, {pipeline_mode = #tpu.pipeline_mode<synchronous>, transform_indices = @transform_4, window_bounds = array<i64: 8, 1>}, {transform_indices = @transform_5, window_bounds = array<i64: 1, 8, 512>}]} {
    %c0 = arith.constant 0 : index
    %c0_0 = arith.constant 0 : index
    %c108 = arith.constant 108 : index
    %0 = vector.load %arg1[%c0, %c0_0, %c108] : memref<1x4x782xbf16, #tpu.memory_space<vmem>>, vector<1x4x512xbf16>
    %1 = vector.shape_cast %0 : vector<1x4x512xbf16> to vector<4x512xbf16>
    %2 = arith.extf %1 : vector<4x512xbf16> to vector<4x512xf32>
    %c0_1 = arith.constant 0 : index
    %c0_2 = arith.constant 0 : index
    %c109 = arith.constant 109 : index
    %3 = vector.load %arg1[%c0_1, %c0_2, %c109] : memref<1x4x782xbf16, #tpu.memory_space<vmem>>, vector<1x4x512xbf16>
    %4 = vector.shape_cast %3 : vector<1x4x512xbf16> to vector<4x512xbf16>
    %5 = arith.extf %4 : vector<4x512xbf16> to vector<4x512xf32>
    %c0_3 = arith.constant 0 : index
    %c0_4 = arith.constant 0 : index
    %c110 = arith.constant 110 : index
    %6 = vector.load %arg1[%c0_3, %c0_4, %c110] : memref<1x4x782xbf16, #tpu.memory_space<vmem>>, vector<1x4x512xbf16>
    %7 = vector.shape_cast %6 : vector<1x4x512xbf16> to vector<4x512xbf16>
    %8 = arith.extf %7 : vector<4x512xbf16> to vector<4x512xf32>
    %c0_5 = arith.constant 0 : index
    %c0_6 = arith.constant 0 : index
    %c134 = arith.constant 134 : index
    %9 = vector.load %arg1[%c0_5, %c0_6, %c134] : memref<1x4x782xbf16, #tpu.memory_space<vmem>>, vector<1x4x512xbf16>
    %10 = vector.shape_cast %9 : vector<1x4x512xbf16> to vector<4x512xbf16>
    %11 = arith.extf %10 : vector<4x512xbf16> to vector<4x512xf32>
    %c0_7 = arith.constant 0 : index
    %c0_8 = arith.constant 0 : index
    %c135 = arith.constant 135 : index
    %12 = vector.load %arg1[%c0_7, %c0_8, %c135] : memref<1x4x782xbf16, #tpu.memory_space<vmem>>, vector<1x4x512xbf16>
    %13 = vector.shape_cast %12 : vector<1x4x512xbf16> to vector<4x512xbf16>
    %14 = arith.extf %13 : vector<4x512xbf16> to vector<4x512xf32>
    %c0_9 = arith.constant 0 : index
    %c0_10 = arith.constant 0 : index
    %c136 = arith.constant 136 : index
    %15 = vector.load %arg1[%c0_9, %c0_10, %c136] : memref<1x4x782xbf16, #tpu.memory_space<vmem>>, vector<1x4x512xbf16>
    %16 = vector.shape_cast %15 : vector<1x4x512xbf16> to vector<4x512xbf16>
    %17 = arith.extf %16 : vector<4x512xbf16> to vector<4x512xf32>
    %c0_11 = arith.constant 0 : index
    %c0_12 = arith.constant 0 : index
    %c160 = arith.constant 160 : index
    %18 = vector.load %arg1[%c0_11, %c0_12, %c160] : memref<1x4x782xbf16, #tpu.memory_space<vmem>>, vector<1x4x512xbf16>
    %19 = vector.shape_cast %18 : vector<1x4x512xbf16> to vector<4x512xbf16>
    %20 = arith.extf %19 : vector<4x512xbf16> to vector<4x512xf32>
    %c0_13 = arith.constant 0 : index
    %c0_14 = arith.constant 0 : index
    %c161 = arith.constant 161 : index
    %21 = vector.load %arg1[%c0_13, %c0_14, %c161] : memref<1x4x782xbf16, #tpu.memory_space<vmem>>, vector<1x4x512xbf16>
    %22 = vector.shape_cast %21 : vector<1x4x512xbf16> to vector<4x512xbf16>
    %23 = arith.extf %22 : vector<4x512xbf16> to vector<4x512xf32>
    %c0_15 = arith.constant 0 : index
    %c0_16 = arith.constant 0 : index
    %c162 = arith.constant 162 : index
    %24 = vector.load %arg1[%c0_15, %c0_16, %c162] : memref<1x4x782xbf16, #tpu.memory_space<vmem>>, vector<1x4x512xbf16>
    %25 = vector.shape_cast %24 : vector<1x4x512xbf16> to vector<4x512xbf16>
    %26 = arith.extf %25 : vector<4x512xbf16> to vector<4x512xf32>
    %c0_17 = arith.constant 0 : index
    %c0_18 = arith.constant 0 : index
    %c54 = arith.constant 54 : index
    %27 = vector.load %arg1[%c0_17, %c0_18, %c54] : memref<1x4x782xbf16, #tpu.memory_space<vmem>>, vector<1x4x512xbf16>
    %28 = vector.shape_cast %27 : vector<1x4x512xbf16> to vector<4x512xbf16>
    %29 = arith.extf %28 : vector<4x512xbf16> to vector<4x512xf32>
    %c0_19 = arith.constant 0 : index
    %c0_20 = arith.constant 0 : index
    %c57 = arith.constant 57 : index
    %30 = vector.load %arg1[%c0_19, %c0_20, %c57] : memref<1x4x782xbf16, #tpu.memory_space<vmem>>, vector<1x4x512xbf16>
    %31 = vector.shape_cast %30 : vector<1x4x512xbf16> to vector<4x512xbf16>
    %32 = arith.extf %31 : vector<4x512xbf16> to vector<4x512xf32>
    %c0_21 = arith.constant 0 : index
    %c0_22 = arith.constant 0 : index
    %c60 = arith.constant 60 : index
    %33 = vector.load %arg1[%c0_21, %c0_22, %c60] : memref<1x4x782xbf16, #tpu.memory_space<vmem>>, vector<1x4x512xbf16>
    %34 = vector.shape_cast %33 : vector<1x4x512xbf16> to vector<4x512xbf16>
    %35 = arith.extf %34 : vector<4x512xbf16> to vector<4x512xf32>
    %c0_23 = arith.constant 0 : index
    %c0_24 = arith.constant 0 : index
    %c132 = arith.constant 132 : index
    %36 = vector.load %arg1[%c0_23, %c0_24, %c132] : memref<1x4x782xbf16, #tpu.memory_space<vmem>>, vector<1x4x512xbf16>
    %37 = vector.shape_cast %36 : vector<1x4x512xbf16> to vector<4x512xbf16>
    %38 = arith.extf %37 : vector<4x512xbf16> to vector<4x512xf32>
    %c0_25 = arith.constant 0 : index
    %c0_26 = arith.constant 0 : index
    %c135_27 = arith.constant 135 : index
    %39 = vector.load %arg1[%c0_25, %c0_26, %c135_27] : memref<1x4x782xbf16, #tpu.memory_space<vmem>>, vector<1x4x512xbf16>
    %40 = vector.shape_cast %39 : vector<1x4x512xbf16> to vector<4x512xbf16>
    %41 = arith.extf %40 : vector<4x512xbf16> to vector<4x512xf32>
    %c0_28 = arith.constant 0 : index
    %c0_29 = arith.constant 0 : index
    %c138 = arith.constant 138 : index
    %42 = vector.load %arg1[%c0_28, %c0_29, %c138] : memref<1x4x782xbf16, #tpu.memory_space<vmem>>, vector<1x4x512xbf16>
    %43 = vector.shape_cast %42 : vector<1x4x512xbf16> to vector<4x512xbf16>
    %44 = arith.extf %43 : vector<4x512xbf16> to vector<4x512xf32>
    %c0_30 = arith.constant 0 : index
    %c0_31 = arith.constant 0 : index
    %c210 = arith.constant 210 : index
    %45 = vector.load %arg1[%c0_30, %c0_31, %c210] : memref<1x4x782xbf16, #tpu.memory_space<vmem>>, vector<1x4x512xbf16>
    %46 = vector.shape_cast %45 : vector<1x4x512xbf16> to vector<4x512xbf16>
    %47 = arith.extf %46 : vector<4x512xbf16> to vector<4x512xf32>
    %c0_32 = arith.constant 0 : index
    %c0_33 = arith.constant 0 : index
    %c213 = arith.constant 213 : index
    %48 = vector.load %arg1[%c0_32, %c0_33, %c213] : memref<1x4x782xbf16, #tpu.memory_space<vmem>>, vector<1x4x512xbf16>
    %49 = vector.shape_cast %48 : vector<1x4x512xbf16> to vector<4x512xbf16>
    %50 = arith.extf %49 : vector<4x512xbf16> to vector<4x512xf32>
    %c0_34 = arith.constant 0 : index
    %c0_35 = arith.constant 0 : index
    %c216 = arith.constant 216 : index
    %51 = vector.load %arg1[%c0_34, %c0_35, %c216] : memref<1x4x782xbf16, #tpu.memory_space<vmem>>, vector<1x4x512xbf16>
    %52 = vector.shape_cast %51 : vector<1x4x512xbf16> to vector<4x512xbf16>
    %53 = arith.extf %52 : vector<4x512xbf16> to vector<4x512xf32>
    %c0_36 = arith.constant 0 : index
    %c0_37 = arith.constant 0 : index
    %c0_38 = arith.constant 0 : index
    %54 = vector.load %arg1[%c0_36, %c0_37, %c0_38] : memref<1x4x782xbf16, #tpu.memory_space<vmem>>, vector<1x4x512xbf16>
    %55 = vector.shape_cast %54 : vector<1x4x512xbf16> to vector<4x512xbf16>
    %56 = arith.extf %55 : vector<4x512xbf16> to vector<4x512xf32>
    %c0_39 = arith.constant 0 : index
    %c0_40 = arith.constant 0 : index
    %c5 = arith.constant 5 : index
    %57 = vector.load %arg1[%c0_39, %c0_40, %c5] : memref<1x4x782xbf16, #tpu.memory_space<vmem>>, vector<1x4x512xbf16>
    %58 = vector.shape_cast %57 : vector<1x4x512xbf16> to vector<4x512xbf16>
    %59 = arith.extf %58 : vector<4x512xbf16> to vector<4x512xf32>
    %c0_41 = arith.constant 0 : index
    %c0_42 = arith.constant 0 : index
    %c10 = arith.constant 10 : index
    %60 = vector.load %arg1[%c0_41, %c0_42, %c10] : memref<1x4x782xbf16, #tpu.memory_space<vmem>>, vector<1x4x512xbf16>
    %61 = vector.shape_cast %60 : vector<1x4x512xbf16> to vector<4x512xbf16>
    %62 = arith.extf %61 : vector<4x512xbf16> to vector<4x512xf32>
    %c0_43 = arith.constant 0 : index
    %c0_44 = arith.constant 0 : index
    %c130 = arith.constant 130 : index
    %63 = vector.load %arg1[%c0_43, %c0_44, %c130] : memref<1x4x782xbf16, #tpu.memory_space<vmem>>, vector<1x4x512xbf16>
    %64 = vector.shape_cast %63 : vector<1x4x512xbf16> to vector<4x512xbf16>
    %65 = arith.extf %64 : vector<4x512xbf16> to vector<4x512xf32>
    %c0_45 = arith.constant 0 : index
    %c0_46 = arith.constant 0 : index
    %c135_47 = arith.constant 135 : index
    %66 = vector.load %arg1[%c0_45, %c0_46, %c135_47] : memref<1x4x782xbf16, #tpu.memory_space<vmem>>, vector<1x4x512xbf16>
    %67 = vector.shape_cast %66 : vector<1x4x512xbf16> to vector<4x512xbf16>
    %68 = arith.extf %67 : vector<4x512xbf16> to vector<4x512xf32>
    %c0_48 = arith.constant 0 : index
    %c0_49 = arith.constant 0 : index
    %c140 = arith.constant 140 : index
    %69 = vector.load %arg1[%c0_48, %c0_49, %c140] : memref<1x4x782xbf16, #tpu.memory_space<vmem>>, vector<1x4x512xbf16>
    %70 = vector.shape_cast %69 : vector<1x4x512xbf16> to vector<4x512xbf16>
    %71 = arith.extf %70 : vector<4x512xbf16> to vector<4x512xf32>
    %c0_50 = arith.constant 0 : index
    %c0_51 = arith.constant 0 : index
    %c260 = arith.constant 260 : index
    %72 = vector.load %arg1[%c0_50, %c0_51, %c260] : memref<1x4x782xbf16, #tpu.memory_space<vmem>>, vector<1x4x512xbf16>
    %73 = vector.shape_cast %72 : vector<1x4x512xbf16> to vector<4x512xbf16>
    %74 = arith.extf %73 : vector<4x512xbf16> to vector<4x512xf32>
    %c0_52 = arith.constant 0 : index
    %c0_53 = arith.constant 0 : index
    %c265 = arith.constant 265 : index
    %75 = vector.load %arg1[%c0_52, %c0_53, %c265] : memref<1x4x782xbf16, #tpu.memory_space<vmem>>, vector<1x4x512xbf16>
    %76 = vector.shape_cast %75 : vector<1x4x512xbf16> to vector<4x512xbf16>
    %77 = arith.extf %76 : vector<4x512xbf16> to vector<4x512xf32>
    %c0_54 = arith.constant 0 : index
    %c0_55 = arith.constant 0 : index
    %c270 = arith.constant 270 : index
    %78 = vector.load %arg1[%c0_54, %c0_55, %c270] : memref<1x4x782xbf16, #tpu.memory_space<vmem>>, vector<1x4x512xbf16>
    %79 = vector.shape_cast %78 : vector<1x4x512xbf16> to vector<4x512xbf16>
    %80 = arith.extf %79 : vector<4x512xbf16> to vector<4x512xf32>
    %81 = tpu.concatenate %2, %5, %8, %11, %14, %17, %20, %23, %26, %29, %32, %35, %38, %41, %44, %47 in 0 : vector<4x512xf32>, vector<4x512xf32>, vector<4x512xf32>, vector<4x512xf32>, vector<4x512xf32>, vector<4x512xf32>, vector<4x512xf32>, vector<4x512xf32>, vector<4x512xf32>, vector<4x512xf32>, vector<4x512xf32>, vector<4x512xf32>, vector<4x512xf32>, vector<4x512xf32>, vector<4x512xf32>, vector<4x512xf32> -> vector<64x512xf32>
    %82 = tpu.concatenate %50, %53, %56, %59, %62, %65, %68, %71, %74, %77, %80 in 0 : vector<4x512xf32>, vector<4x512xf32>, vector<4x512xf32>, vector<4x512xf32>, vector<4x512xf32>, vector<4x512xf32>, vector<4x512xf32>, vector<4x512xf32>, vector<4x512xf32>, vector<4x512xf32>, vector<4x512xf32> -> vector<44x512xf32>
    %83 = tpu.concatenate %81, %82 in 0 : vector<64x512xf32>, vector<44x512xf32> -> vector<108x512xf32>
    %84 = arith.truncf %83 : vector<108x512xf32> to vector<108x512xbf16>
    %c0_56 = arith.constant 0 : index
    %c0_57 = arith.constant 0 : index
    %85 = vector.load %arg2[%c0_56, %c0_57] : memref<12x108xbf16, #tpu.memory_space<vmem>>, vector<12x108xbf16>
    %cst = arith.constant dense<0.000000e+00> : vector<12x512xf32>
    %86 = tpu.matmul %85, %84, %cst {dimension_numbers = #tpu.dot_dimension_numbers<[1], [0], [0], [1], [0, 0, 1, 1], [], []>} : vector<12x108xbf16>, vector<108x512xbf16>, vector<12x512xf32> -> vector<12x512xf32>
    %c0_58 = arith.constant 0 : index
    %c0_59 = arith.constant 0 : index
    %87 = vector.load %arg4[%c0_58, %c0_59] : memref<12x1xf32, #tpu.memory_space<vmem>>, vector<12x1xf32>
    %88 = vector.broadcast %87 : vector<12x1xf32> to vector<12x512xf32>
    %89 = arith.addf %86, %88 : vector<12x512xf32>
    %cst_60 = arith.constant 0.000000e+00 : f32
    %90 = vector.broadcast %cst_60 : f32 to vector<12x512xf32>
    %91 = arith.maximumf %89, %90 : vector<12x512xf32>
    %c0_61 = arith.constant 0 : index
    %c0_62 = arith.constant 0 : index
    %92 = vector.load %arg3[%c0_61, %c0_62] : memref<8x12xbf16, #tpu.memory_space<vmem>>, vector<8x12xbf16>
    %93 = arith.truncf %91 : vector<12x512xf32> to vector<12x512xbf16>
    %cst_63 = arith.constant dense<0.000000e+00> : vector<8x512xf32>
    %94 = tpu.matmul %92, %93, %cst_63 {dimension_numbers = #tpu.dot_dimension_numbers<[1], [0], [0], [1], [0, 0, 1, 1], [], []>} : vector<8x12xbf16>, vector<12x512xbf16>, vector<8x512xf32> -> vector<8x512xf32>
    %c0_64 = arith.constant 0 : index
    %c0_65 = arith.constant 0 : index
    %95 = vector.load %arg5[%c0_64, %c0_65] : memref<8x1xf32, #tpu.memory_space<vmem>>, vector<8x1xf32>
    %96 = vector.broadcast %95 : vector<8x1xf32> to vector<8x512xf32>
    %97 = arith.addf %94, %96 : vector<8x512xf32>
    %cst_66 = arith.constant 0.000000e+00 : f32
    %98 = vector.broadcast %cst_66 : f32 to vector<8x512xf32>
    %99 = arith.maximumf %97, %98 : vector<8x512xf32>
    %c0_67 = arith.constant 0 : index
    %c0_68 = arith.constant 0 : index
    %c0_69 = arith.constant 0 : index
    %100 = vector.load %arg6[%c0_67, %c0_68, %c0_69] : memref<1x8x512xf32, #tpu.memory_space<vmem>>, vector<1x8x512xf32>
    %101 = vector.shape_cast %100 : vector<1x8x512xf32> to vector<8x512xf32>
    %102 = vector.shape_cast %99 : vector<8x512xf32> to vector<1x8x512xf32>
    tpu.vector_store %arg6[%c0_67, %c0_68, %c0_69], %102 {strides = array<i32>} : memref<1x8x512xf32, #tpu.memory_space<vmem>>, vector<1x8x512xf32>,
    return
  }
  func.func @transform_0(%arg0: i32) -> (i32, i32, i32) {
    %c0_i32 = arith.constant 0 : i32
    %c0_i32_0 = arith.constant 0 : i32
    %c0_i32_1 = arith.constant 0 : i32
    return %arg0, %c0_i32, %c0_i32_0 : i32, i32, i32
  }
  func.func @transform_1(%arg0: i32) -> (i32, i32) {
    %c0_i32 = arith.constant 0 : i32
    %c0_i32_0 = arith.constant 0 : i32
    %c0_i32_1 = arith.constant 0 : i32
    return %c0_i32, %c0_i32_0 : i32, i32
  }
  func.func @transform_2(%arg0: i32) -> (i32, i32) {
    %c0_i32 = arith.constant 0 : i32
    %c0_i32_0 = arith.constant 0 : i32
    %c0_i32_1 = arith.constant 0 : i32
    return %c0_i32, %c0_i32_0 : i32, i32
  }
  func.func @transform_3(%arg0: i32) -> (i32, i32) {
    %c0_i32 = arith.constant 0 : i32
    %c0_i32_0 = arith.constant 0 : i32
    %c0_i32_1 = arith.constant 0 : i32
    return %c0_i32, %c0_i32_0 : i32, i32
  }
  func.func @transform_4(%arg0: i32) -> (i32, i32) {
    %c0_i32 = arith.constant 0 : i32
    %c0_i32_0 = arith.constant 0 : i32
    %c0_i32_1 = arith.constant 0 : i32
    return %c0_i32, %c0_i32_0 : i32, i32
  }
  func.func @transform_5(%arg0: i32) -> (i32, i32, i32) {
    %c0_i32 = arith.constant 0 : i32
    %c0_i32_0 = arith.constant 0 : i32
    %c0_i32_1 = arith.constant 0 : i32
    return %arg0, %c0_i32, %c0_i32_0 : i32, i32, i32
  }
}

</mosaic_0001>

<llo_original>
// kernel: feature_enhance_forward.1
$region0: #{feature_enhance_forward.1}
  #allocation0 [shape = 'u32[]', space=smem, size = 0x4, offset = 0x4, fixed_abs, tag = 'smem constant byte address 0x4 - core index']
  #allocation1 [shape = 'u32[144,128]{1,0:T(1,128)}', space=vmem, size = 0x12000, scoped, tag = 'internal scratch']
  %s0 = inlined_call_operand.vmem [shape: bf16[2,4,782], index: 0, kind: input, shape index: {}]
  %s1 = inlined_call_operand.vmem [shape: bf16[12,108], index: 1, kind: input, shape index: {}]
  %s2 = inlined_call_operand.vmem [shape: bf16[8,12], index: 2, kind: input, shape index: {}]
  %s3 = inlined_call_operand.vmem [shape: f32[12,1], index: 3, kind: input, shape index: {}]
  %s4 = inlined_call_operand.vmem [shape: f32[8,1], index: 4, kind: input, shape index: {}]
  %s5 = inlined_call_operand.vmem [shape: f32[2,8,512], index: 5, kind: output, shape index: {}]
  %s6 = sld [smem:[#allocation0]]
  $region53: #{feature_enhance_forward.1} parent=0
    _
  %s8 = ssub.s32 1, %s6
  %s9 = scalar_select 0, %s8, %s6
  loop: start=0, step=1, limit=4
  $region2: #{feature_enhance_forward.1} parent=0 // loop_pre_header
    _
  $region3: #{feature_enhance_forward.1} parent=0 // loop_header
    %s11 = sphi 0, %s15
    %p12 = scmp.ge.s32.totalorder %s11, 4
    %s21 = sphi 0, %s23
    %s24 = sphi 0, %s21
    %s25 = sphi 0, %s24
    %s41 = sphi 0, %s25
    %s45 = sphi 0, %s45
    %s47 = sphi 0, %s45
    %s48 = sphi 0, %s47
    %s62 = sphi 0, %s48
    %s66 = sphi 0, %s66
    %s68 = sphi 0, %s66
    %s69 = sphi 0, %s68
    %s83 = sphi 0, %s69
    %s87 = sphi 0, %s87
    %s89 = sphi 0, %s87
    %s90 = sphi 0, %s89
    %s104 = sphi 0, %s90
    %s108 = sphi 0, %s108
    %s110 = sphi 0, %s108
    %s111 = sphi 0, %s110
    %s125 = sphi 0, %s111
    %s131 = sphi 0, %s133
    %s134 = sphi 0, %s131
    %s135 = sphi 0, %s134
    %s151 = sphi 0, %s135
  $region4: #{feature_enhance_forward.1} parent=0 // loop_header_branch
    %14 = sbr.rel (%p12) target = $region8
  $region5: #{feature_enhance_forward.1} parent=0 // loop_body
    %s16 = ssub.s32 %s11, 1
    %s17 = ssub.s32 %s11, 2
    %s18 = sadd.s32 %s11, 1
    %s19 = ssub.s32 %s11, %s18
    %p20 = scmp.eq.s32.totalorder %s19, 0
    %s22 = sadd.s32 %s21, 1
    %s23 = scalar_select %p20, %s21, %s22
    %p26 = pneg %p20
    %p27 = scmp.eq.s32.totalorder %s11, 1
    %p28 = por %p26, %p27
    %p29 = scmp.ne.s32.totalorder %s21, %s24
    %p30 = scmp.eq.s32.totalorder %s11, 0
    %p31 = por %p29, %p30
    %p32 = scmp.ne.s32.totalorder %s21, %s24
    %p33 = scmp.eq.s32.totalorder %s16, 1
    %p34 = por %p32, %p33
    %p35 = scmp.ne.s32.totalorder %s24, %s25
    %p36 = scmp.eq.s32.totalorder %s16, 0
    %p37 = por %p35, %p36
    %p38 = scmp.ne.s32.totalorder %s24, %s25
    %p39 = scmp.eq.s32.totalorder %s17, 1
    %p40 = por %p38, %p39
    %p42 = scmp.ne.s32.totalorder %s25, %s41
    %p43 = scmp.eq.s32.totalorder %s17, 0
    %p44 = por %p42, %p43
    %s46 = sadd.s32 %s45, 1
    %p49 = scmp.eq.s32.totalorder %s11, 1
    %p50 = scmp.ne.s32.totalorder %s45, %s47
    %p51 = scmp.eq.s32.totalorder %s11, 0
    %p52 = por %p50, %p51
    %p53 = scmp.ne.s32.totalorder %s45, %s47
    %p54 = scmp.eq.s32.totalorder %s16, 1
    %p55 = por %p53, %p54
    %p56 = scmp.ne.s32.totalorder %s47, %s48
    %p57 = scmp.eq.s32.totalorder %s16, 0
    %p58 = por %p56, %p57
    %p59 = scmp.ne.s32.totalorder %s47, %s48
    %p60 = scmp.eq.s32.totalorder %s17, 1
    %p61 = por %p59, %p60
    %p63 = scmp.ne.s32.totalorder %s48, %s62
    %p64 = scmp.eq.s32.totalorder %s17, 0
    %p65 = por %p63, %p64
    %s67 = sadd.s32 %s66, 1
    %p70 = scmp.eq.s32.totalorder %s11, 1
    %p71 = scmp.ne.s32.totalorder %s66, %s68
    %p72 = scmp.eq.s32.totalorder %s11, 0
    %p73 = por %p71, %p72
    %p74 = scmp.ne.s32.totalorder %s66, %s68
    %p75 = scmp.eq.s32.totalorder %s16, 1
    %p76 = por %p74, %p75
    %p77 = scmp.ne.s32.totalorder %s68, %s69
    %p78 = scmp.eq.s32.totalorder %s16, 0
    %p79 = por %p77, %p78
    %p80 = scmp.ne.s32.totalorder %s68, %s69
    %p81 = scmp.eq.s32.totalorder %s17, 1
    %p82 = por %p80, %p81
    %p84 = scmp.ne.s32.totalorder %s69, %s83
    %p85 = scmp.eq.s32.totalorder %s17, 0
    %p86 = por %p84, %p85
    %s88 = sadd.s32 %s87, 1
    %p91 = scmp.eq.s32.totalorder %s11, 1
    %p92 = scmp.ne.s32.totalorder %s87, %s89
    %p93 = scmp.eq.s32.totalorder %s11, 0
    %p94 = por %p92, %p93
    %p95 = scmp.ne.s32.totalorder %s87, %s89
    %p96 = scmp.eq.s32.totalorder %s16, 1
    %p97 = por %p95, %p96
    %p98 = scmp.ne.s32.totalorder %s89, %s90
    %p99 = scmp.eq.s32.totalorder %s16, 0
    %p100 = por %p98, %p99
    %p101 = scmp.ne.s32.totalorder %s89, %s90
    %p102 = scmp.eq.s32.totalorder %s17, 1
    %p103 = por %p101, %p102
    %p105 = scmp.ne.s32.totalorder %s90, %s104
    %p106 = scmp.eq.s32.totalorder %s17, 0
    %p107 = por %p105, %p106
    %s109 = sadd.s32 %s108, 1
    %p112 = scmp.eq.s32.totalorder %s11, 1
    %p113 = scmp.ne.s32.totalorder %s108, %s110
    %p114 = scmp.eq.s32.totalorder %s11, 0
    %p115 = por %p113, %p114
    %p116 = scmp.ne.s32.totalorder %s108, %s110
    %p117 = scmp.eq.s32.totalorder %s16, 1
    %p118 = por %p116, %p117
    %p119 = scmp.ne.s32.totalorder %s110, %s111
    %p120 = scmp.eq.s32.totalorder %s16, 0
    %p121 = por %p119, %p120
    %p122 = scmp.ne.s32.totalorder %s110, %s111
    %p123 = scmp.eq.s32.totalorder %s17, 1
    %p124 = por %p122, %p123
    %p126 = scmp.ne.s32.totalorder %s111, %s125
    %p127 = scmp.eq.s32.totalorder %s17, 0
    %p128 = por %p126, %p127
    %s129 = ssub.s32 %s11, %s18
    %p130 = scmp.eq.s32.totalorder %s129, 0
    %s132 = sadd.s32 %s131, 1
    %s133 = scalar_select %p130, %s131, %s132
    %p136 = pneg %p130
    %p137 = scmp.eq.s32.totalorder %s11, 1
    %p138 = por %p136, %p137
    %p139 = scmp.ne.s32.totalorder %s131, %s134
    %p140 = scmp.eq.s32.totalorder %s11, 0
    %p141 = por %p139, %p140
    %p142 = scmp.ne.s32.totalorder %s131, %s134
    %p143 = scmp.eq.s32.totalorder %s16, 1
    %p144 = por %p142, %p143
    %p145 = scmp.ne.s32.totalorder %s134, %s135
    %p146 = scmp.eq.s32.totalorder %s16, 0
    %p147 = por %p145, %p146
    %p148 = scmp.ne.s32.totalorder %s134, %s135
    %p149 = scmp.eq.s32.totalorder %s17, 1
    %p150 = por %p148, %p149
    %p152 = scmp.ne.s32.totalorder %s135, %s151
    %p153 = scmp.eq.s32.totalorder %s17, 0
    %p154 = por %p152, %p153
    %p155 = scmp.le.s32.totalorder 1, %s11
    %p156 = scmp.lt.s32.totalorder %s11, 3
    %p157 = pnand %p155, %p156
    %p158 = pneg %p157
    // Predicated region
    $region9: #{feature_enhance_forward.1} parent=5 // pred_check
      _
    $region10: #{feature_enhance_forward.1} parent=5 // pred_check_branch
      %160 = sbr.rel (%p157) target = $region12
    $region11: #{feature_enhance_forward.1} parent=5 // pred_region
      %s161 = ssub.s32 %s11, 1
      // Predicated region
      $region13: #{feature_enhance_forward.1} parent=11 // pred_check
        %p162 = pneg %p58
      $region14: #{feature_enhance_forward.1} parent=11 // pred_check_branch
        %164 = sbr.rel (%p162) target = $region16
      $region15: #{feature_enhance_forward.1} parent=11 // pred_region
        _
      $region16: #{feature_enhance_forward.1} parent=11 // pred_fallthru
        _
      // Predicated region
      $region17: #{feature_enhance_forward.1} parent=11 // pred_check
        %p165 = pneg %p79
      $region18: #{feature_enhance_forward.1} parent=11 // pred_check_branch
        %167 = sbr.rel (%p165) target = $region20
      $region19: #{feature_enhance_forward.1} parent=11 // pred_region
        _
      $region20: #{feature_enhance_forward.1} parent=11 // pred_fallthru
        _
      // Predicated region
      $region21: #{feature_enhance_forward.1} parent=11 // pred_check
        %p168 = pneg %p100
      $region22: #{feature_enhance_forward.1} parent=11 // pred_check_branch
        %170 = sbr.rel (%p168) target = $region24
      $region23: #{feature_enhance_forward.1} parent=11 // pred_region
        _
      $region24: #{feature_enhance_forward.1} parent=11 // pred_fallthru
        _
      // Predicated region
      $region25: #{feature_enhance_forward.1} parent=11 // pred_check
        %p171 = pneg %p121
      $region26: #{feature_enhance_forward.1} parent=11 // pred_check_branch
        %173 = sbr.rel (%p171) target = $region28
      $region27: #{feature_enhance_forward.1} parent=11 // pred_region
        _
      $region28: #{feature_enhance_forward.1} parent=11 // pred_fallthru
        _
    $region12: #{feature_enhance_forward.1} parent=5 // pred_fallthru
      _
    %p174 = scmp.lt.s32.totalorder %s11, 2
    // Predicated region
    $region29: #{feature_enhance_forward.1} parent=5 // pred_check
      %p175 = pneg %p174
    $region30: #{feature_enhance_forward.1} parent=5 // pred_check_branch
      %177 = sbr.rel (%p175) target = $region32
    $region31: #{feature_enhance_forward.1} parent=5 // pred_region
      // Predicated region
      $region33: #{feature_enhance_forward.1} parent=31 // pred_check
        %p178 = pneg %p31
      $region34: #{feature_enhance_forward.1} parent=31 // pred_check_branch
        %180 = sbr.rel (%p178) target = $region36
      $region35: #{feature_enhance_forward.1} parent=31 // pred_region
        %p181 = scmp.lt.s32.totalorder %s11, 1
        %s182 = scalar_select %p181, %s11, 1
        %s183 = smul.addr %s182, 7
        %s184 = smul.addr %s183, 2
        %s185 = scalar_lea.vmem %s0, %s184
      $region36: #{feature_enhance_forward.1} parent=31 // pred_fallthru
        _
    $region32: #{feature_enhance_forward.1} parent=5 // pred_fallthru
      _
    %p186 = scmp.le.s32.totalorder 1, %s11
    %p187 = scmp.lt.s32.totalorder %s11, 3
    %p188 = pnand %p186, %p187
    %p189 = pneg %p188
    // Predicated region
    $region37: #{feature_enhance_forward.1} parent=5 // pred_check
      _
    $region38: #{feature_enhance_forward.1} parent=5 // pred_check_branch
      %191 = sbr.rel (%p188) target = $region40
    $region39: #{feature_enhance_forward.1} parent=5 // pred_region
      %s192 = ssub.s32 %s11, 1
      %p193 = scmp.lt.s32.totalorder %s16, 1
      %s194 = scalar_select %p193, %s16, 1
      %s195 = smul.addr %s194, 7
      %s196 = smul.addr %s195, 2
      %s197 = scalar_lea.vmem %s0, %s196
      %p198 = pneg %p37
      %p199 = pneg %p34
      %p200 = pneg %p58
      %p201 = pneg %p55
      %p202 = pneg %p79
      %p203 = pneg %p76
      %p204 = pneg %p100
      %p205 = pneg %p97
      %p206 = pneg %p121
      %p207 = pneg %p118
      %p208 = pneg %p147
      %p209 = pneg %p144
      %p210 = scmp.lt.s32.totalorder %s16, 1
      %s211 = scalar_select %p210, %s16, 1
      %s212 = smul.addr %s211, 4
      %s213 = smul.addr %s212, 8
      %s214 = scalar_lea.vmem %s5, %s213
      %p215 = scmp.lt.s32.totalorder %s16, 1
      %s216 = scalar_select %p215, %s16, 1
      %s217 = smul.addr %s216, 7
      %s218 = smul.addr %s217, 2
      %s219 = scalar_lea.vmem %s0, %s218
      %p220 = scmp.lt.s32.totalorder %s16, 1
      %s221 = scalar_select %p220, %s16, 1
      %s222 = smul.addr %s221, 4
      %s223 = smul.addr %s222, 8
      %s224 = scalar_lea.vmem %s5, %s223
      %v226 = vld [vmem:[%s219] sm:$0xff]
      %v227 = vld [vmem:[%s219 + $0x8] sm:$0x3]
      %v228 = vunpack.c.l.bf16 %v226
      %v229 = vunpack.c.h.bf16 %v226
      %v230 = vunpack.c.l.bf16 %v227
      %v231 = vld [vmem:[%s219 + $0x2] sm:$0xff]
      %v232 = vld [vmem:[%s219 + $0xa] sm:$0x3]
      %v233 = vunpack.c.l.bf16 %v231
      %v234 = vunpack.c.h.bf16 %v231
      %v235 = vunpack.c.l.bf16 %v232
      %v236 = vld [vmem:[%s219 + $0x4] sm:$0xff]
      %v237 = vld [vmem:[%s219 + $0xc] sm:$0x3]
      %v238 = vunpack.c.l.bf16 %v236
      %v239 = vunpack.c.h.bf16 %v236
      %v240 = vunpack.c.l.bf16 %v237
      %v244 = vcombine.high %v228, %v228
      %v245 = vcombine.high %v229, %v229
      %v248 = vcombine.low %v228, %v228
      %v249 = vcombine.low %v229, %v229
      %v250 = vcombine.low %v230, %v230
      %251 = vrot.lane.b32.xlu0 %v248, 127
      %v252 = vpop.permute.xlu0 %251
      %253 = vrot.lane.b32.xlu0 %v228, 127
      %v254 = vpop.permute.xlu0 %253
      %255 = vrot.lane.b32.xlu0 %v249, 127
      %v256 = vpop.permute.xlu0 %255
      %257 = vrot.lane.b32.xlu0 %v229, 127
      %v258 = vpop.permute.xlu0 %257
      %259 = vrot.lane.b32.xlu0 %v250, 127
      %v260 = vpop.permute.xlu0 %259
      %vm261 = vcmask 1039360
      %v262 = vsel %vm261, %v252, %v254
      %v263 = vsel %vm261, %v254, %v256
      %v264 = vsel %vm261, %v256, %v258
      %v265 = vsel %vm261, %v258, %v260
      %271 = vrot.lane.b32.xlu0 %v228, 126
      %v272 = vpop.permute.xlu0 %271
      %273 = vrot.lane.b32.xlu0 %v244, 126
      %v274 = vpop.permute.xlu0 %273
      %275 = vrot.lane.b32.xlu0 %v229, 126
      %v276 = vpop.permute.xlu0 %275
      %277 = vrot.lane.b32.xlu0 %v245, 126
      %v278 = vpop.permute.xlu0 %277
      %279 = vrot.lane.b32.xlu0 %v230, 126
      %v280 = vpop.permute.xlu0 %279
      %vm281 = vcmask 1031168
      %v282 = vsel %vm281, %v272, %v274
      %v283 = vsel %vm281, %v274, %v276
      %v284 = vsel %vm281, %v276, %v278
      %v285 = vsel %vm281, %v278, %v280
      %v294 = vcombine.low %v233, %v233
      %v295 = vcombine.low %v234, %v234
      %v296 = vcombine.low %v235, %v235
      %297 = vrot.lane.b32.xlu0 %v294, 102
      %v298 = vpop.permute.xlu0 %297
      %299 = vrot.lane.b32.xlu0 %v233, 102
      %v300 = vpop.permute.xlu0 %299
      %301 = vrot.lane.b32.xlu0 %v295, 102
      %v302 = vpop.permute.xlu0 %301
      %303 = vrot.lane.b32.xlu0 %v234, 102
      %v304 = vpop.permute.xlu0 %303
      %305 = vrot.lane.b32.xlu0 %v296, 102
      %v306 = vpop.permute.xlu0 %305
      %vm307 = vcmask 834560
      %v308 = vsel %vm307, %v298, %v300
      %v309 = vsel %vm307, %v300, %v302
      %v310 = vsel %vm307, %v302, %v304
      %v311 = vsel %vm307, %v304, %v306
      %v317 = vcombine.high %v233, %v233
      %v318 = vcombine.high %v234, %v234
      %319 = vrot.lane.b32.xlu0 %v233, 101
      %v320 = vpop.permute.xlu0 %319
      %321 = vrot.lane.b32.xlu0 %v317, 101
      %v322 = vpop.permute.xlu0 %321
      %323 = vrot.lane.b32.xlu0 %v234, 101
      %v324 = vpop.permute.xlu0 %323
      %325 = vrot.lane.b32.xlu0 %v318, 101
      %v326 = vpop.permute.xlu0 %325
      %327 = vrot.lane.b32.xlu0 %v235, 101
      %v328 = vpop.permute.xlu0 %327
      %vm329 = vcmask 826368
      %v330 = vsel %vm329, %v320, %v322
      %v331 = vsel %vm329, %v322, %v324
      %v332 = vsel %vm329, %v324, %v326
      %v333 = vsel %vm329, %v326, %v328
      %339 = vrot.lane.b32.xlu0 %v294, 100
      %v340 = vpop.permute.xlu0 %339
      %341 = vrot.lane.b32.xlu0 %v233, 100
      %v342 = vpop.permute.xlu0 %341
      %343 = vrot.lane.b32.xlu0 %v295, 100
      %v344 = vpop.permute.xlu0 %343
      %345 = vrot.lane.b32.xlu0 %v234, 100
      %v346 = vpop.permute.xlu0 %345
      %347 = vrot.lane.b32.xlu0 %v296, 100
      %v348 = vpop.permute.xlu0 %347
      %vm349 = vcmask 818176
      %v350 = vsel %vm349, %v340, %v342
      %v351 = vsel %vm349, %v342, %v344
      %v352 = vsel %vm349, %v344, %v346
      %v353 = vsel %vm349, %v346, %v348
      %359 = vrot.lane.b32.xlu0 %v233, 76
      %v360 = vpop.permute.xlu0 %359
      %361 = vrot.lane.b32.xlu0 %v317, 76
      %v362 = vpop.permute.xlu0 %361
      %363 = vrot.lane.b32.xlu0 %v234, 76
      %v364 = vpop.permute.xlu0 %363
      %365 = vrot.lane.b32.xlu0 %v318, 76
      %v366 = vpop.permute.xlu0 %365
      %367 = vrot.lane.b32.xlu0 %v235, 76
      %v368 = vpop.permute.xlu0 %367
      %vm369 = vcmask 621568
      %v370 = vsel %vm369, %v360, %v362
      %v371 = vsel %vm369, %v362, %v364
      %v372 = vsel %vm369, %v364, %v366
      %v373 = vsel %vm369, %v366, %v368
      %379 = vrot.lane.b32.xlu0 %v294, 75
      %v380 = vpop.permute.xlu0 %379
      %381 = vrot.lane.b32.xlu0 %v233, 75
      %v382 = vpop.permute.xlu0 %381
      %383 = vrot.lane.b32.xlu0 %v295, 75
      %v384 = vpop.permute.xlu0 %383
      %385 = vrot.lane.b32.xlu0 %v234, 75
      %v386 = vpop.permute.xlu0 %385
      %387 = vrot.lane.b32.xlu0 %v296, 75
      %v388 = vpop.permute.xlu0 %387
      %vm389 = vcmask 613376
      %v390 = vsel %vm389, %v380, %v382
      %v391 = vsel %vm389, %v382, %v384
      %v392 = vsel %vm389, %v384, %v386
      %v393 = vsel %vm389, %v386, %v388
      %399 = vrot.lane.b32.xlu0 %v233, 74
      %v400 = vpop.permute.xlu0 %399
      %401 = vrot.lane.b32.xlu0 %v317, 74
      %v402 = vpop.permute.xlu0 %401
      %403 = vrot.lane.b32.xlu0 %v234, 74
      %v404 = vpop.permute.xlu0 %403
      %405 = vrot.lane.b32.xlu0 %v318, 74
      %v406 = vpop.permute.xlu0 %405
      %407 = vrot.lane.b32.xlu0 %v235, 74
      %v408 = vpop.permute.xlu0 %407
      %vm409 = vcmask 605184
      %v410 = vsel %vm409, %v400, %v402
      %v411 = vsel %vm409, %v402, %v404
      %v412 = vsel %vm409, %v404, %v406
      %v413 = vsel %vm409, %v406, %v408
      %419 = vrot.lane.b32.xlu0 %v248, 54
      %v420 = vpop.permute.xlu0 %419
      %421 = vrot.lane.b32.xlu0 %v228, 54
      %v422 = vpop.permute.xlu0 %421
      %423 = vrot.lane.b32.xlu0 %v249, 54
      %v424 = vpop.permute.xlu0 %423
      %425 = vrot.lane.b32.xlu0 %v229, 54
      %v426 = vpop.permute.xlu0 %425
      %427 = vrot.lane.b32.xlu0 %v250, 54
      %v428 = vpop.permute.xlu0 %427
      %vm429 = vcmask 441344
      %v430 = vsel %vm429, %v420, %v422
      %v431 = vsel %vm429, %v422, %v424
      %v432 = vsel %vm429, %v424, %v426
      %v433 = vsel %vm429, %v426, %v428
      %439 = vrot.lane.b32.xlu0 %v228, 51
      %v440 = vpop.permute.xlu0 %439
      %441 = vrot.lane.b32.xlu0 %v244, 51
      %v442 = vpop.permute.xlu0 %441
      %443 = vrot.lane.b32.xlu0 %v229, 51
      %v444 = vpop.permute.xlu0 %443
      %445 = vrot.lane.b32.xlu0 %v245, 51
      %v446 = vpop.permute.xlu0 %445
      %447 = vrot.lane.b32.xlu0 %v230, 51
      %v448 = vpop.permute.xlu0 %447
      %vm449 = vcmask 416768
      %v450 = vsel %vm449, %v440, %v442
      %v451 = vsel %vm449, %v442, %v444
      %v452 = vsel %vm449, %v444, %v446
      %v453 = vsel %vm449, %v446, %v448
      %459 = vrot.lane.b32.xlu0 %v248, 48
      %v460 = vpop.permute.xlu0 %459
      %461 = vrot.lane.b32.xlu0 %v228, 48
      %v462 = vpop.permute.xlu0 %461
      %463 = vrot.lane.b32.xlu0 %v249, 48
      %v464 = vpop.permute.xlu0 %463
      %465 = vrot.lane.b32.xlu0 %v229, 48
      %v466 = vpop.permute.xlu0 %465
      %467 = vrot.lane.b32.xlu0 %v250, 48
      %v468 = vpop.permute.xlu0 %467
      %vm469 = vcmask 392192
      %v470 = vsel %vm469, %v460, %v462
      %v471 = vsel %vm469, %v462, %v464
      %v472 = vsel %vm469, %v464, %v466
      %v473 = vsel %vm469, %v466, %v468
      %479 = vrot.lane.b32.xlu0 %v233, 104
      %v480 = vpop.permute.xlu0 %479
      %481 = vrot.lane.b32.xlu0 %v317, 104
      %v482 = vpop.permute.xlu0 %481
      %483 = vrot.lane.b32.xlu0 %v234, 104
      %v484 = vpop.permute.xlu0 %483
      %485 = vrot.lane.b32.xlu0 %v318, 104
      %v486 = vpop.permute.xlu0 %485
      %487 = vrot.lane.b32.xlu0 %v235, 104
      %v488 = vpop.permute.xlu0 %487
      %vm489 = vcmask 850944
      %v490 = vsel %vm489, %v480, %v482
      %v491 = vsel %vm489, %v482, %v484
      %v492 = vsel %vm489, %v484, %v486
      %v493 = vsel %vm489, %v486, %v488
      %499 = vrot.lane.b32.xlu0 %v294, 101
      %v500 = vpop.permute.xlu0 %499
      %501 = vrot.lane.b32.xlu0 %v295, 101
      %v502 = vpop.permute.xlu0 %501
      %503 = vrot.lane.b32.xlu0 %v296, 101
      %v504 = vpop.permute.xlu0 %503
      %v505 = vsel %vm329, %v500, %v320
      %v506 = vsel %vm329, %v320, %v502
      %v507 = vsel %vm329, %v502, %v324
      %v508 = vsel %vm329, %v324, %v504
      %514 = vrot.lane.b32.xlu0 %v233, 98
      %v515 = vpop.permute.xlu0 %514
      %516 = vrot.lane.b32.xlu0 %v317, 98
      %v517 = vpop.permute.xlu0 %516
      %518 = vrot.lane.b32.xlu0 %v234, 98
      %v519 = vpop.permute.xlu0 %518
      %520 = vrot.lane.b32.xlu0 %v318, 98
      %v521 = vpop.permute.xlu0 %520
      %522 = vrot.lane.b32.xlu0 %v235, 98
      %v523 = vpop.permute.xlu0 %522
      %vm524 = vcmask 801792
      %v525 = vsel %vm524, %v515, %v517
      %v526 = vsel %vm524, %v517, %v519
      %v527 = vsel %vm524, %v519, %v521
      %v528 = vsel %vm524, %v521, %v523
      %534 = vrot.lane.b32.xlu0 %v294, 26
      %v535 = vpop.permute.xlu0 %534
      %536 = vrot.lane.b32.xlu0 %v233, 26
      %v537 = vpop.permute.xlu0 %536
      %538 = vrot.lane.b32.xlu0 %v295, 26
      %v539 = vpop.permute.xlu0 %538
      %540 = vrot.lane.b32.xlu0 %v234, 26
      %v541 = vpop.permute.xlu0 %540
      %542 = vrot.lane.b32.xlu0 %v296, 26
      %v543 = vpop.permute.xlu0 %542
      %vm544 = vcmask 211968
      %v545 = vsel %vm544, %v535, %v537
      %v546 = vsel %vm544, %v537, %v539
      %v547 = vsel %vm544, %v539, %v541
      %v548 = vsel %vm544, %v541, %v543
      %vm554 = vcmask 1043456
      %v555 = vsel %vm554, %v228, %v262
      %v556 = vsel %vm554, %v244, %v263
      %v557 = vsel %vm554, %v229, %v264
      %v558 = vsel %vm554, %v245, %v265
      %v559 = vsel %vm554, %v230, %v260
      %v560 = vsel %vm554, %v282, %v298
      %v561 = vsel %vm554, %v283, %v308
      %v562 = vsel %vm554, %v284, %v309
      %v563 = vsel %vm554, %v285, %v310
      %v564 = vsel %vm554, %v280, %v311
      %v565 = vsel %vm554, %v320, %v340
      %v566 = vsel %vm554, %v330, %v350
      %v567 = vsel %vm554, %v331, %v351
      %v568 = vsel %vm554, %v332, %v352
      %v569 = vsel %vm554, %v333, %v353
      %v570 = vsel %vm554, %v360, %v380
      %v571 = vsel %vm554, %v370, %v390
      %v572 = vsel %vm554, %v371, %v391
      %v573 = vsel %vm554, %v372, %v392
      %v574 = vsel %vm554, %v373, %v393
      %v575 = vsel %vm554, %v400, %v420
      %v576 = vsel %vm554, %v410, %v430
      %v577 = vsel %vm554, %v411, %v431
      %v578 = vsel %vm554, %v412, %v432
      %v579 = vsel %vm554, %v413, %v433
      %v580 = vsel %vm554, %v440, %v460
      %v581 = vsel %vm554, %v450, %v470
      %v582 = vsel %vm554, %v451, %v471
      %v583 = vsel %vm554, %v452, %v472
      %v584 = vsel %vm554, %v453, %v473
      %v585 = vsel %vm554, %v480, %v500
      %v586 = vsel %vm554, %v490, %v505
      %v587 = vsel %vm554, %v491, %v506
      %v588 = vsel %vm554, %v492, %v507
      %v589 = vsel %vm554, %v493, %v508
      %v590 = vsel %vm554, %v515, %v535
      %v591 = vsel %vm554, %v525, %v545
      %v592 = vsel %vm554, %v526, %v546
      %v593 = vsel %vm554, %v527, %v547
      %v594 = vsel %vm554, %v528, %v548
      %597 = vrot.lane.b32.xlu0 %v294, 125
      %v598 = vpop.permute.xlu0 %597
      %599 = vrot.lane.b32.xlu0 %v233, 125
      %v600 = vpop.permute.xlu0 %599
      %601 = vrot.lane.b32.xlu0 %v295, 125
      %v602 = vpop.permute.xlu0 %601
      %603 = vrot.lane.b32.xlu0 %v234, 125
      %v604 = vpop.permute.xlu0 %603
      %605 = vrot.lane.b32.xlu0 %v296, 125
      %v606 = vpop.permute.xlu0 %605
      %vm607 = vcmask 1022976
      %v608 = vsel %vm607, %v598, %v600
      %v609 = vsel %vm607, %v600, %v602
      %v610 = vsel %vm607, %v602, %v604
      %v611 = vsel %vm607, %v604, %v606
      %617 = vrot.lane.b32.xlu0 %v228, 85
      %v618 = vpop.permute.xlu0 %617
      %619 = vrot.lane.b32.xlu0 %v244, 85
      %v620 = vpop.permute.xlu0 %619
      %621 = vrot.lane.b32.xlu0 %v229, 85
      %v622 = vpop.permute.xlu0 %621
      %623 = vrot.lane.b32.xlu0 %v245, 85
      %v624 = vpop.permute.xlu0 %623
      %vm625 = vcmask 695296
      %v626 = vsel %vm625, %v618, %v620
      %v627 = vsel %vm625, %v620, %v622
      %v628 = vsel %vm625, %v622, %v624
      %634 = vrot.lane.b32.xlu0 %v248, 80
      %v635 = vpop.permute.xlu0 %634
      %636 = vrot.lane.b32.xlu0 %v228, 80
      %v637 = vpop.permute.xlu0 %636
      %638 = vrot.lane.b32.xlu0 %v249, 80
      %v639 = vpop.permute.xlu0 %638
      %640 = vrot.lane.b32.xlu0 %v229, 80
      %v641 = vpop.permute.xlu0 %640
      %642 = vrot.lane.b32.xlu0 %v250, 80
      %v643 = vpop.permute.xlu0 %642
      %vm644 = vcmask 654336
      %v645 = vsel %vm644, %v635, %v637
      %v646 = vsel %vm644, %v637, %v639
      %v647 = vsel %vm644, %v639, %v641
      %v648 = vsel %vm644, %v641, %v643
      %654 = vrot.lane.b32.xlu0 %v228, 75
      %v655 = vpop.permute.xlu0 %654
      %656 = vrot.lane.b32.xlu0 %v244, 75
      %v657 = vpop.permute.xlu0 %656
      %658 = vrot.lane.b32.xlu0 %v229, 75
      %v659 = vpop.permute.xlu0 %658
      %660 = vrot.lane.b32.xlu0 %v245, 75
      %v661 = vpop.permute.xlu0 %660
      %662 = vrot.lane.b32.xlu0 %v230, 75
      %v663 = vpop.permute.xlu0 %662
      %v664 = vsel %vm389, %v655, %v657
      %v665 = vsel %vm389, %v657, %v659
      %v666 = vsel %vm389, %v659, %v661
      %v667 = vsel %vm389, %v661, %v663
      %673 = vrot.lane.b32.xlu0 %v294, 83
      %v674 = vpop.permute.xlu0 %673
      %675 = vrot.lane.b32.xlu0 %v233, 83
      %v676 = vpop.permute.xlu0 %675
      %677 = vrot.lane.b32.xlu0 %v295, 83
      %v678 = vpop.permute.xlu0 %677
      %679 = vrot.lane.b32.xlu0 %v234, 83
      %v680 = vpop.permute.xlu0 %679
      %681 = vrot.lane.b32.xlu0 %v296, 83
      %v682 = vpop.permute.xlu0 %681
      %vm683 = vcmask 678912
      %v684 = vsel %vm683, %v674, %v676
      %v685 = vsel %vm683, %v676, %v678
      %v686 = vsel %vm683, %v678, %v680
      %v687 = vsel %vm683, %v680, %v682
      %693 = vrot.lane.b32.xlu0 %v233, 78
      %v694 = vpop.permute.xlu0 %693
      %695 = vrot.lane.b32.xlu0 %v317, 78
      %v696 = vpop.permute.xlu0 %695
      %697 = vrot.lane.b32.xlu0 %v234, 78
      %v698 = vpop.permute.xlu0 %697
      %699 = vrot.lane.b32.xlu0 %v318, 78
      %v700 = vpop.permute.xlu0 %699
      %701 = vrot.lane.b32.xlu0 %v235, 78
      %v702 = vpop.permute.xlu0 %701
      %vm703 = vcmask 637952
      %v704 = vsel %vm703, %v694, %v696
      %v705 = vsel %vm703, %v696, %v698
      %v706 = vsel %vm703, %v698, %v700
      %v707 = vsel %vm703, %v700, %v702
      %713 = vrot.lane.b32.xlu0 %v294, 73
      %v714 = vpop.permute.xlu0 %713
      %715 = vrot.lane.b32.xlu0 %v233, 73
      %v716 = vpop.permute.xlu0 %715
      %717 = vrot.lane.b32.xlu0 %v295, 73
      %v718 = vpop.permute.xlu0 %717
      %719 = vrot.lane.b32.xlu0 %v234, 73
      %v720 = vpop.permute.xlu0 %719
      %721 = vrot.lane.b32.xlu0 %v296, 73
      %v722 = vpop.permute.xlu0 %721
      %vm723 = vcmask 596992
      %v724 = vsel %vm723, %v714, %v716
      %v725 = vsel %vm723, %v716, %v718
      %v726 = vsel %vm723, %v718, %v720
      %v727 = vsel %vm723, %v720, %v722
      %v736 = vcombine.high %v238, %v238
      %v737 = vcombine.high %v239, %v239
      %738 = vrot.lane.b32.xlu0 %v238, 81
      %v739 = vpop.permute.xlu0 %738
      %740 = vrot.lane.b32.xlu0 %v736, 81
      %v741 = vpop.permute.xlu0 %740
      %742 = vrot.lane.b32.xlu0 %v239, 81
      %v743 = vpop.permute.xlu0 %742
      %744 = vrot.lane.b32.xlu0 %v737, 81
      %v745 = vpop.permute.xlu0 %744
      %746 = vrot.lane.b32.xlu0 %v240, 81
      %v747 = vpop.permute.xlu0 %746
      %vm748 = vcmask 662528
      %v749 = vsel %vm748, %v739, %v741
      %v750 = vsel %vm748, %v741, %v743
      %v751 = vsel %vm748, %v743, %v745
      %v752 = vsel %vm748, %v745, %v747
      %v758 = vcombine.low %v238, %v238
      %v759 = vcombine.low %v239, %v239
      %v760 = vcombine.low %v240, %v240
      %761 = vrot.lane.b32.xlu0 %v758, 76
      %v762 = vpop.permute.xlu0 %761
      %763 = vrot.lane.b32.xlu0 %v238, 76
      %v764 = vpop.permute.xlu0 %763
      %765 = vrot.lane.b32.xlu0 %v759, 76
      %v766 = vpop.permute.xlu0 %765
      %767 = vrot.lane.b32.xlu0 %v239, 76
      %v768 = vpop.permute.xlu0 %767
      %769 = vrot.lane.b32.xlu0 %v760, 76
      %v770 = vpop.permute.xlu0 %769
      %v771 = vsel %vm369, %v762, %v764
      %v772 = vsel %vm369, %v764, %v766
      %v773 = vsel %vm369, %v766, %v768
      %v774 = vsel %vm369, %v768, %v770
      %780 = vrot.lane.b32.xlu0 %v238, 71
      %v781 = vpop.permute.xlu0 %780
      %782 = vrot.lane.b32.xlu0 %v736, 71
      %v783 = vpop.permute.xlu0 %782
      %784 = vrot.lane.b32.xlu0 %v239, 71
      %v785 = vpop.permute.xlu0 %784
      %786 = vrot.lane.b32.xlu0 %v737, 71
      %v787 = vpop.permute.xlu0 %786
      %788 = vrot.lane.b32.xlu0 %v240, 71
      %v789 = vpop.permute.xlu0 %788
      %vm790 = vcmask 580608
      %v791 = vsel %vm790, %v781, %v783
      %v792 = vsel %vm790, %v783, %v785
      %v793 = vsel %vm790, %v785, %v787
      %v794 = vsel %vm790, %v787, %v789
      %v795 = vsel %vm554, %v233, %v608
      %v796 = vsel %vm554, %v317, %v609
      %v797 = vsel %vm554, %v234, %v610
      %v798 = vsel %vm554, %v318, %v611
      %v799 = vsel %vm554, %v235, %v606
      %v800 = vsel %vm554, %v618, %v635
      %v801 = vsel %vm554, %v626, %v645
      %v802 = vsel %vm554, %v627, %v646
      %v803 = vsel %vm554, %v628, %v647
      %v804 = vsel %vm554, %v624, %v648
      %v805 = vsel %vm554, %v655, %v674
      %v806 = vsel %vm554, %v664, %v684
      %v807 = vsel %vm554, %v665, %v685
      %v808 = vsel %vm554, %v666, %v686
      %v809 = vsel %vm554, %v667, %v687
      %v810 = vsel %vm554, %v694, %v714
      %v811 = vsel %vm554, %v704, %v724
      %v812 = vsel %vm554, %v705, %v725
      %v813 = vsel %vm554, %v706, %v726
      %v814 = vsel %vm554, %v707, %v727
      %v815 = vsel %vm554, %v739, %v762
      %v816 = vsel %vm554, %v749, %v771
      %v817 = vsel %vm554, %v750, %v772
      %v818 = vsel %vm554, %v751, %v773
      %v819 = vsel %vm554, %v752, %v774
      %845 = vrot.lane.b32.xlu0 %v795, 23
      %v846 = vpop.permute.xlu0 %845
      %847 = vrot.lane.b32.xlu0 %v796, 23
      %v848 = vpop.permute.xlu0 %847
      %849 = vrot.lane.b32.xlu0 %v797, 23
      %v850 = vpop.permute.xlu0 %849
      %851 = vrot.lane.b32.xlu0 %v798, 23
      %v852 = vpop.permute.xlu0 %851
      %853 = vrot.lane.b32.xlu0 %v799, 23
      %v854 = vpop.permute.xlu0 %853
      %855 = vrot.lane.b32.xlu0 %v800, 23
      %v856 = vpop.permute.xlu0 %855
      %857 = vrot.lane.b32.xlu0 %v801, 23
      %v858 = vpop.permute.xlu0 %857
      %859 = vrot.lane.b32.xlu0 %v802, 23
      %v860 = vpop.permute.xlu0 %859
      %861 = vrot.lane.b32.xlu0 %v803, 23
      %v862 = vpop.permute.xlu0 %861
      %863 = vrot.lane.b32.xlu0 %v804, 23
      %v864 = vpop.permute.xlu0 %863
      %865 = vrot.lane.b32.xlu0 %v805, 23
      %v866 = vpop.permute.xlu0 %865
      %867 = vrot.lane.b32.xlu0 %v806, 23
      %v868 = vpop.permute.xlu0 %867
      %869 = vrot.lane.b32.xlu0 %v807, 23
      %v870 = vpop.permute.xlu0 %869
      %871 = vrot.lane.b32.xlu0 %v808, 23
      %v872 = vpop.permute.xlu0 %871
      %873 = vrot.lane.b32.xlu0 %v809, 23
      %v874 = vpop.permute.xlu0 %873
      %875 = vrot.lane.b32.xlu0 %v810, 23
      %v876 = vpop.permute.xlu0 %875
      %877 = vrot.lane.b32.xlu0 %v811, 23
      %v878 = vpop.permute.xlu0 %877
      %879 = vrot.lane.b32.xlu0 %v812, 23
      %v880 = vpop.permute.xlu0 %879
      %881 = vrot.lane.b32.xlu0 %v813, 23
      %v882 = vpop.permute.xlu0 %881
      %883 = vrot.lane.b32.xlu0 %v814, 23
      %v884 = vpop.permute.xlu0 %883
      %885 = vrot.lane.b32.xlu0 %v815, 23
      %v886 = vpop.permute.xlu0 %885
      %887 = vrot.lane.b32.xlu0 %v816, 23
      %v888 = vpop.permute.xlu0 %887
      %889 = vrot.lane.b32.xlu0 %v817, 23
      %v890 = vpop.permute.xlu0 %889
      %891 = vrot.lane.b32.xlu0 %v818, 23
      %v892 = vpop.permute.xlu0 %891
      %893 = vrot.lane.b32.xlu0 %v819, 23
      %v894 = vpop.permute.xlu0 %893
      %895 = vrot.lane.b32.xlu0 %v781, 23
      %v896 = vpop.permute.xlu0 %895
      %897 = vrot.lane.b32.xlu0 %v791, 23
      %v898 = vpop.permute.xlu0 %897
      %899 = vrot.lane.b32.xlu0 %v792, 23
      %v900 = vpop.permute.xlu0 %899
      %901 = vrot.lane.b32.xlu0 %v793, 23
      %v902 = vpop.permute.xlu0 %901
      %903 = vrot.lane.b32.xlu0 %v794, 23
      %v904 = vpop.permute.xlu0 %903
      %vm905 = vcmask 187392
      %v906 = vsel %vm905, %v846, %v848
      %v907 = vsel %vm905, %v848, %v850
      %v908 = vsel %vm905, %v850, %v852
      %v909 = vsel %vm905, %v852, %v854
      %v910 = vsel %vm905, %v856, %v858
      %v911 = vsel %vm905, %v858, %v860
      %v912 = vsel %vm905, %v860, %v862
      %v913 = vsel %vm905, %v862, %v864
      %v914 = vsel %vm905, %v866, %v868
      %v915 = vsel %vm905, %v868, %v870
      %v916 = vsel %vm905, %v870, %v872
      %v917 = vsel %vm905, %v872, %v874
      %v918 = vsel %vm905, %v876, %v878
      %v919 = vsel %vm905, %v878, %v880
      %v920 = vsel %vm905, %v880, %v882
      %v921 = vsel %vm905, %v882, %v884
      %v922 = vsel %vm905, %v886, %v888
      %v923 = vsel %vm905, %v888, %v890
      %v924 = vsel %vm905, %v890, %v892
      %v925 = vsel %vm905, %v892, %v894
      %v926 = vsel %vm905, %v896, %v898
      %v927 = vsel %vm905, %v898, %v900
      %v928 = vsel %vm905, %v900, %v902
      %v929 = vsel %vm905, %v902, %v904
      %v960 = vpack.c.bf16 %v560, %v555
      %v961 = vpack.c.bf16 %v561, %v556
      %v962 = vpack.c.bf16 %v562, %v557
      %v963 = vpack.c.bf16 %v563, %v558
      %v964 = vpack.c.bf16 %v564, %v559
      %v965 = vpack.c.bf16 %v570, %v565
      %v966 = vpack.c.bf16 %v571, %v566
      %v967 = vpack.c.bf16 %v572, %v567
      %v968 = vpack.c.bf16 %v573, %v568
      %v969 = vpack.c.bf16 %v574, %v569
      %v970 = vpack.c.bf16 %v580, %v575
      %v971 = vpack.c.bf16 %v581, %v576
      %v972 = vpack.c.bf16 %v582, %v577
      %v973 = vpack.c.bf16 %v583, %v578
      %v974 = vpack.c.bf16 %v584, %v579
      %v975 = vpack.c.bf16 %v590, %v585
      %v976 = vpack.c.bf16 %v591, %v586
      %v977 = vpack.c.bf16 %v592, %v587
      %v978 = vpack.c.bf16 %v593, %v588
      %v979 = vpack.c.bf16 %v594, %v589
      %v980 = vpack.c.bf16 %v856, %v846
      %v981 = vpack.c.bf16 %v910, %v906
      %v982 = vpack.c.bf16 %v911, %v907
      %v983 = vpack.c.bf16 %v912, %v908
      %v984 = vpack.c.bf16 %v913, %v909
      %v985 = vpack.c.bf16 %v876, %v866
      %v986 = vpack.c.bf16 %v918, %v914
      %v987 = vpack.c.bf16 %v919, %v915
      %v988 = vpack.c.bf16 %v920, %v916
      %v989 = vpack.c.bf16 %v921, %v917
      %v990 = vpack.c.bf16 %v896, %v886
      %v991 = vpack.c.bf16 %v926, %v922
      %v992 = vpack.c.bf16 %v927, %v923
      %v993 = vpack.c.bf16 %v928, %v924
      %v994 = vpack.c.bf16 %v929, %v925
      %v995 = vld [vmem:[%s1] sm:$0xf]
      %v996 = vld [vmem:[%s1 + $0x4] sm:$0x3]
      %v997 = vld [vmem:[%s3] sm:$0xff]
      %v998 = vld [vmem:[%s3 + $0x8] sm:$0xf]
      %1000 = vset.pattern.permute.xlu0 0
      %1001 = vperm.xlu0 %1000, %v997
      %v1002 = vpop.permute.xlu0 %1001
      %1005 = vset.pattern.permute.xlu0 0
      %1006 = vperm.xlu0 %1005, %v998
      %v1007 = vpop.permute.xlu0 %1006
      %v1011 = vunpack.c.l.b16 %v995
      %v1012 = vunpack.c.l.b16 %v996
      %v1013 = vpack.c.b16 %v1012, %v1011
      %1049 = vrot.lane.b32.xlu0 %v960, 20
      %v1050 = vpop.permute.xlu0 %1049
      %1051 = vrot.lane.b32.xlu0 %v961, 20
      %v1052 = vpop.permute.xlu0 %1051
      %1053 = vrot.lane.b32.xlu0 %v962, 20
      %v1054 = vpop.permute.xlu0 %1053
      %1055 = vrot.lane.b32.xlu0 %v963, 20
      %v1056 = vpop.permute.xlu0 %1055
      %1057 = vrot.lane.b32.xlu0 %v964, 20
      %v1058 = vpop.permute.xlu0 %1057
      %1059 = vrot.lane.b32.xlu0 %v965, 20
      %v1060 = vpop.permute.xlu0 %1059
      %1061 = vrot.lane.b32.xlu0 %v966, 20
      %v1062 = vpop.permute.xlu0 %1061
      %1063 = vrot.lane.b32.xlu0 %v967, 20
      %v1064 = vpop.permute.xlu0 %1063
      %1065 = vrot.lane.b32.xlu0 %v968, 20
      %v1066 = vpop.permute.xlu0 %1065
      %1067 = vrot.lane.b32.xlu0 %v969, 20
      %v1068 = vpop.permute.xlu0 %1067
      %1069 = vrot.lane.b32.xlu0 %v970, 20
      %v1070 = vpop.permute.xlu0 %1069
      %1071 = vrot.lane.b32.xlu0 %v971, 20
      %v1072 = vpop.permute.xlu0 %1071
      %1073 = vrot.lane.b32.xlu0 %v972, 20
      %v1074 = vpop.permute.xlu0 %1073
      %1075 = vrot.lane.b32.xlu0 %v973, 20
      %v1076 = vpop.permute.xlu0 %1075
      %1077 = vrot.lane.b32.xlu0 %v974, 20
      %v1078 = vpop.permute.xlu0 %1077
      %1079 = vrot.lane.b32.xlu0 %v975, 20
      %v1080 = vpop.permute.xlu0 %1079
      %1081 = vrot.lane.b32.xlu0 %v976, 20
      %v1082 = vpop.permute.xlu0 %1081
      %1083 = vrot.lane.b32.xlu0 %v977, 20
      %v1084 = vpop.permute.xlu0 %1083
      %1085 = vrot.lane.b32.xlu0 %v978, 20
      %v1086 = vpop.permute.xlu0 %1085
      %1087 = vrot.lane.b32.xlu0 %v979, 20
      %v1088 = vpop.permute.xlu0 %1087
      %1089 = vrot.lane.b32.xlu0 %v980, 20
      %v1090 = vpop.permute.xlu0 %1089
      %1091 = vrot.lane.b32.xlu0 %v981, 20
      %v1092 = vpop.permute.xlu0 %1091
      %1093 = vrot.lane.b32.xlu0 %v982, 20
      %v1094 = vpop.permute.xlu0 %1093
      %1095 = vrot.lane.b32.xlu0 %v983, 20
      %v1096 = vpop.permute.xlu0 %1095
      %1097 = vrot.lane.b32.xlu0 %v984, 20
      %v1098 = vpop.permute.xlu0 %1097
      %1099 = vrot.lane.b32.xlu0 %v985, 20
      %v1100 = vpop.permute.xlu0 %1099
      %1101 = vrot.lane.b32.xlu0 %v986, 20
      %v1102 = vpop.permute.xlu0 %1101
      %1103 = vrot.lane.b32.xlu0 %v987, 20
      %v1104 = vpop.permute.xlu0 %1103
      %1105 = vrot.lane.b32.xlu0 %v988, 20
      %v1106 = vpop.permute.xlu0 %1105
      %1107 = vrot.lane.b32.xlu0 %v989, 20
      %v1108 = vpop.permute.xlu0 %1107
      %1109 = vrot.lane.b32.xlu0 %v990, 20
      %v1110 = vpop.permute.xlu0 %1109
      %1111 = vrot.lane.b32.xlu0 %v991, 20
      %v1112 = vpop.permute.xlu0 %1111
      %1113 = vrot.lane.b32.xlu0 %v992, 20
      %v1114 = vpop.permute.xlu0 %1113
      %1115 = vrot.lane.b32.xlu0 %v993, 20
      %v1116 = vpop.permute.xlu0 %1115
      %1117 = vrot.lane.b32.xlu0 %v994, 20
      %v1118 = vpop.permute.xlu0 %1117
      %vm1119 = vcmask 162816
      %v1120 = vsel %vm1119, %v1050, %v1052
      %v1121 = vsel %vm1119, %v1052, %v1054
      %v1122 = vsel %vm1119, %v1054, %v1056
      %v1123 = vsel %vm1119, %v1056, %v1058
      %v1124 = vsel %vm1119, %v1060, %v1062
      %v1125 = vsel %vm1119, %v1062, %v1064
      %v1126 = vsel %vm1119, %v1064, %v1066
      %v1127 = vsel %vm1119, %v1066, %v1068
      %v1128 = vsel %vm1119, %v1070, %v1072
      %v1129 = vsel %vm1119, %v1072, %v1074
      %v1130 = vsel %vm1119, %v1074, %v1076
      %v1131 = vsel %vm1119, %v1076, %v1078
      %v1132 = vsel %vm1119, %v1080, %v1082
      %v1133 = vsel %vm1119, %v1082, %v1084
      %v1134 = vsel %vm1119, %v1084, %v1086
      %v1135 = vsel %vm1119, %v1086, %v1088
      %v1136 = vsel %vm1119, %v1090, %v1092
      %v1137 = vsel %vm1119, %v1092, %v1094
      %v1138 = vsel %vm1119, %v1094, %v1096
      %v1139 = vsel %vm1119, %v1096, %v1098
      %v1140 = vsel %vm1119, %v1100, %v1102
      %v1141 = vsel %vm1119, %v1102, %v1104
      %v1142 = vsel %vm1119, %v1104, %v1106
      %v1143 = vsel %vm1119, %v1106, %v1108
      %v1144 = vsel %vm1119, %v1110, %v1112
      %v1145 = vsel %vm1119, %v1112, %v1114
      %v1146 = vsel %vm1119, %v1114, %v1116
      %v1147 = vsel %vm1119, %v1116, %v1118
      %vm1172 = vcmask 883712
      %v1174 = vsel %vm1172, %v1013, 0
      %vm1176 = vcmask 1045504
      %v1178 = vsel %vm1176, %v1144, 0
      %v1181 = vsel %vm1176, %v1145, 0
      %v1184 = vsel %vm1176, %v1146, 0
      %v1187 = vsel %vm1176, %v1147, 0
      %1189 = vmatprep.subr.bf16.mxu0 %v1121
      %1190 = vmatpush1.bf16.msra.mxu0 %v1120
      %1191 = vmatprep.subr.bf16.mxu0 %v1125
      %1192 = vmatpush1.bf16.msra.mxu0 %v1124
      %1193 = vmatprep.subr.bf16.mxu0 %v1129
      %1194 = vmatpush1.bf16.msra.mxu0 %v1128
      %1195 = vmatprep.subr.bf16.mxu0 %v1133
      %1196 = vmatpush1.bf16.msra.mxu0 %v1132
      %1197 = vmatprep.subr.bf16.mxu0 %v1137
      %1198 = vmatpush1.bf16.msra.mxu0 %v1136
      %1199 = vmatprep.subr.bf16.mxu0 %v1141
      %1200 = vmatpush1.bf16.msra.mxu0 %v1140
      %1201 = vmatprep.subr.bf16.mxu0 %v1181
      %1202 = vmatpush1.bf16.msra.mxu0 %v1178
      %1203 = vmatprep.subr.bf16.mxu0 0
      %1204 = vmatpush1.bf16.msra.mxu0 0
      %1205 = vmatprep.subr.bf16.mxu0 0
      %1206 = vmatpush1.bf16.msra.mxu0 0
      %1207 = vmatprep.subr.bf16.mxu0 0
      %1208 = vmatpush1.bf16.msra.mxu0 0
      %1209 = vmatprep.subr.bf16.mxu0 0
      %1210 = vmatpush1.bf16.msra.mxu0 0
      %1211 = vmatprep.subr.bf16.mxu0 0
      %1212 = vmatpush1.bf16.msra.mxu0 0
      %1213 = vmatprep.subr.bf16.mxu0 0
      %1214 = vmatpush1.bf16.msra.mxu0 0
      %1215 = vmatprep.subr.bf16.mxu0 0
      %1216 = vmatpush1.bf16.msra.mxu0 0
      %1217 = vmatprep.subr.bf16.mxu0 0
      %1218 = vmatpush1.bf16.msra.mxu0 0
      %1219 = vmatprep.subr.bf16.mxu0 0
      %1220 = vmatpush1.bf16.msra.mxu0 0
      %1221 = vmatprep.mubr.bf16.mxu0 0
      %1222 = vmatmul.mubr.bf16.gmra.mrb[0].mxu0 %v1174
      %v1223 = vpop.f32.mrb[0].mxu0
      %v1224 = vadd.f32 %v1002, %v1223
      %v1225 = vpop.f32.mrb[0].mxu0
      %v1226 = vadd.f32 %v1002, %v1225
      %v1227 = vpop.f32.mrb[0].mxu0
      %v1228 = vadd.f32 %v1007, %v1227
      %v1229 = vpop.f32.mrb[0].mxu0
      %v1230 = vadd.f32 %v1007, %v1229
      %1231 = vdwg.mxu0
      %1232 = vmatprep.subr.bf16.mxu0 %v1123
      %1233 = vmatpush1.bf16.msra.mxu0 %v1122
      %1234 = vmatprep.subr.bf16.mxu0 %v1127
      %1235 = vmatpush1.bf16.msra.mxu0 %v1126
      %1236 = vmatprep.subr.bf16.mxu0 %v1131
      %1237 = vmatpush1.bf16.msra.mxu0 %v1130
      %1238 = vmatprep.subr.bf16.mxu0 %v1135
      %1239 = vmatpush1.bf16.msra.mxu0 %v1134
      %1240 = vmatprep.subr.bf16.mxu0 %v1139
      %1241 = vmatpush1.bf16.msra.mxu0 %v1138
      %1242 = vmatprep.subr.bf16.mxu0 %v1143
      %1243 = vmatpush1.bf16.msra.mxu0 %v1142
      %1244 = vmatprep.subr.bf16.mxu0 %v1187
      %1245 = vmatpush1.bf16.msra.mxu0 %v1184
      %1246 = vmatprep.subr.bf16.mxu0 0
      %1247 = vmatpush1.bf16.msra.mxu0 0
      %1248 = vmatprep.subr.bf16.mxu0 0
      %1249 = vmatpush1.bf16.msra.mxu0 0
      %1250 = vmatprep.subr.bf16.mxu0 0
      %1251 = vmatpush1.bf16.msra.mxu0 0
      %1252 = vmatprep.subr.bf16.mxu0 0
      %1253 = vmatpush1.bf16.msra.mxu0 0
      %1254 = vmatprep.subr.bf16.mxu0 0
      %1255 = vmatpush1.bf16.msra.mxu0 0
      %1256 = vmatprep.subr.bf16.mxu0 0
      %1257 = vmatpush1.bf16.msra.mxu0 0
      %1258 = vmatprep.subr.bf16.mxu0 0
      %1259 = vmatpush1.bf16.msra.mxu0 0
      %1260 = vmatprep.subr.bf16.mxu0 0
      %1261 = vmatpush1.bf16.msra.mxu0 0
      %1262 = vmatprep.subr.bf16.mxu0 0
      %1263 = vmatpush1.bf16.msra.mxu0 0
      %1264 = vmatprep.mubr.bf16.mxu0 0
      %1265 = vmatmul.mubr.bf16.gmra.mrb[0].mxu0 %v1174
      %v1266 = vpop.f32.mrb[0].mxu0
      %v1267 = vadd.f32 %v1002, %v1266
      %v1268 = vpop.f32.mrb[0].mxu0
      %v1269 = vadd.f32 %v1002, %v1268
      %v1270 = vpop.f32.mrb[0].mxu0
      %v1271 = vadd.f32 %v1007, %v1270
      %v1272 = vpop.f32.mrb[0].mxu0
      %v1273 = vadd.f32 %v1007, %v1272
      %1274 = vdwg.mxu0
      %v1275 = vmax.f32 %v1224, 0.0
      %v1276 = vmax.f32 %v1226, 0.0
      %v1277 = vmax.f32 %v1267, 0.0
      %v1278 = vmax.f32 %v1269, 0.0
      %v1279 = vmax.f32 %v1228, 0.0
      %v1280 = vmax.f32 %v1230, 0.0
      %v1281 = vmax.f32 %v1271, 0.0
      %v1282 = vmax.f32 %v1273, 0.0
      %v1283 = vld [vmem:[%s2] sm:$0xf]
      %v1284 = vpack.c.bf16 %v1279, %v1275
      %v1285 = vpack.c.bf16 %v1280, %v1276
      %v1286 = vpack.c.bf16 %v1281, %v1277
      %v1287 = vpack.c.bf16 %v1282, %v1278
      %v1288 = vld [vmem:[%s4] sm:$0xff]
      %1290 = vset.pattern.permute.xlu0 0
      %1291 = vperm.xlu0 %1290, %v1288
      %v1292 = vpop.permute.xlu0 %1291
      %vm1294 = vcmask 97280
      %v1296 = vsel %vm1294, %v1283, 0
      %v1299 = vsel %vm1176, %v1284, 0
      %v1302 = vsel %vm1176, %v1285, 0
      %v1305 = vsel %vm1176, %v1286, 0
      %v1308 = vsel %vm1176, %v1287, 0
      %1310 = vmatprep.subr.bf16.mxu0 %v1302
      %1311 = vmatpush1.bf16.msra.mxu0 %v1299
      %1312 = vmatprep.subr.bf16.mxu0 0
      %1313 = vmatpush1.bf16.msra.mxu0 0
      %1314 = vmatprep.subr.bf16.mxu0 0
      %1315 = vmatpush1.bf16.msra.mxu0 0
      %1316 = vmatprep.subr.bf16.mxu0 0
      %1317 = vmatpush1.bf16.msra.mxu0 0
      %1318 = vmatprep.subr.bf16.mxu0 0
      %1319 = vmatpush1.bf16.msra.mxu0 0
      %1320 = vmatprep.subr.bf16.mxu0 0
      %1321 = vmatpush1.bf16.msra.mxu0 0
      %1322 = vmatprep.subr.bf16.mxu0 0
      %1323 = vmatpush1.bf16.msra.mxu0 0
      %1324 = vmatprep.subr.bf16.mxu0 0
      %1325 = vmatpush1.bf16.msra.mxu0 0
      %1326 = vmatprep.subr.bf16.mxu0 0
      %1327 = vmatpush1.bf16.msra.mxu0 0
      %1328 = vmatprep.subr.bf16.mxu0 0
      %1329 = vmatpush1.bf16.msra.mxu0 0
      %1330 = vmatprep.subr.bf16.mxu0 0
      %1331 = vmatpush1.bf16.msra.mxu0 0
      %1332 = vmatprep.subr.bf16.mxu0 0
      %1333 = vmatpush1.bf16.msra.mxu0 0
      %1334 = vmatprep.subr.bf16.mxu0 0
      %1335 = vmatpush1.bf16.msra.mxu0 0
      %1336 = vmatprep.subr.bf16.mxu0 0
      %1337 = vmatpush1.bf16.msra.mxu0 0
      %1338 = vmatprep.subr.bf16.mxu0 0
      %1339 = vmatpush1.bf16.msra.mxu0 0
      %1340 = vmatprep.subr.bf16.mxu0 0
      %1341 = vmatpush1.bf16.msra.mxu0 0
      %1342 = vmatprep.mubr.bf16.mxu0 0
      %1343 = vmatmul.mubr.bf16.gmra.mrb[0].mxu0 %v1296
      %v1344 = vpop.f32.mrb[0].mxu0
      %v1345 = vadd.f32 %v1292, %v1344
      %v1346 = vpop.f32.mrb[0].mxu0
      %v1347 = vadd.f32 %v1292, %v1346
      %v1348 = vpop.f32.mrb[0].mxu0
      %v1349 = vpop.f32.mrb[0].mxu0
      %1350 = vdwg.mxu0
      %1351 = vmatprep.subr.bf16.mxu0 %v1308
      %1352 = vmatpush1.bf16.msra.mxu0 %v1305
      %1353 = vmatprep.subr.bf16.mxu0 0
      %1354 = vmatpush1.bf16.msra.mxu0 0
      %1355 = vmatprep.subr.bf16.mxu0 0
      %1356 = vmatpush1.bf16.msra.mxu0 0
      %1357 = vmatprep.subr.bf16.mxu0 0
      %1358 = vmatpush1.bf16.msra.mxu0 0
      %1359 = vmatprep.subr.bf16.mxu0 0
      %1360 = vmatpush1.bf16.msra.mxu0 0
      %1361 = vmatprep.subr.bf16.mxu0 0
      %1362 = vmatpush1.bf16.msra.mxu0 0
      %1363 = vmatprep.subr.bf16.mxu0 0
      %1364 = vmatpush1.bf16.msra.mxu0 0
      %1365 = vmatprep.subr.bf16.mxu0 0
      %1366 = vmatpush1.bf16.msra.mxu0 0
      %1367 = vmatprep.subr.bf16.mxu0 0
      %1368 = vmatpush1.bf16.msra.mxu0 0
      %1369 = vmatprep.subr.bf16.mxu0 0
      %1370 = vmatpush1.bf16.msra.mxu0 0
      %1371 = vmatprep.subr.bf16.mxu0 0
      %1372 = vmatpush1.bf16.msra.mxu0 0
      %1373 = vmatprep.subr.bf16.mxu0 0
      %1374 = vmatpush1.bf16.msra.mxu0 0
      %1375 = vmatprep.subr.bf16.mxu0 0
      %1376 = vmatpush1.bf16.msra.mxu0 0
      %1377 = vmatprep.subr.bf16.mxu0 0
      %1378 = vmatpush1.bf16.msra.mxu0 0
      %1379 = vmatprep.subr.bf16.mxu0 0
      %1380 = vmatpush1.bf16.msra.mxu0 0
      %1381 = vmatprep.subr.bf16.mxu0 0
      %1382 = vmatpush1.bf16.msra.mxu0 0
      %1383 = vmatprep.mubr.bf16.mxu0 0
      %1384 = vmatmul.mubr.bf16.gmra.mrb[0].mxu0 %v1296
      %v1385 = vpop.f32.mrb[0].mxu0
      %v1386 = vadd.f32 %v1292, %v1385
      %v1387 = vpop.f32.mrb[0].mxu0
      %v1388 = vadd.f32 %v1292, %v1387
      %v1389 = vpop.f32.mrb[0].mxu0
      %v1390 = vpop.f32.mrb[0].mxu0
      %1391 = vdwg.mxu0
      %v1392 = vmax.f32 %v1345, 0.0
      %v1393 = vmax.f32 %v1347, 0.0
      %v1394 = vmax.f32 %v1386, 0.0
      %v1395 = vmax.f32 %v1388, 0.0
      %1396 = vst [vmem:[%s224] sm:$0xff] %v1392
      %1397 = vst [vmem:[%s224 + $0x8] sm:$0xff] %v1393
      %1398 = vst [vmem:[%s224 + $0x10] sm:$0xff] %v1394
      %1399 = vst [vmem:[%s224 + $0x18] sm:$0xff] %v1395
      %p1400 = scmp.lt.s32.totalorder %s16, 1
      %s1401 = scalar_select %p1400, %s16, 1
      %s1402 = smul.addr %s1401, 4
      %s1403 = smul.addr %s1402, 8
      %s1404 = scalar_lea.vmem %s5, %s1403
      // Predicated region
      $region41: #{feature_enhance_forward.1} parent=39 // pred_check
        %p1405 = pneg %p144
      $region42: #{feature_enhance_forward.1} parent=39 // pred_check_branch
        %1407 = sbr.rel (%p1405) target = $region44
      $region43: #{feature_enhance_forward.1} parent=39 // pred_region
        _
      $region44: #{feature_enhance_forward.1} parent=39 // pred_fallthru
        _
    $region40: #{feature_enhance_forward.1} parent=5 // pred_fallthru
      _
    %p1408 = scmp.le.s32.totalorder 2, %s11
    // Predicated region
    $region45: #{feature_enhance_forward.1} parent=5 // pred_check
      %p1409 = pneg %p1408
    $region46: #{feature_enhance_forward.1} parent=5 // pred_check_branch
      %1411 = sbr.rel (%p1409) target = $region48
    $region47: #{feature_enhance_forward.1} parent=5 // pred_region
      %s1412 = ssub.s32 %s11, 2
      // Predicated region
      $region49: #{feature_enhance_forward.1} parent=47 // pred_check
        %p1413 = pneg %p150
      $region50: #{feature_enhance_forward.1} parent=47 // pred_check_branch
        %1415 = sbr.rel (%p1413) target = $region52
      $region51: #{feature_enhance_forward.1} parent=47 // pred_region
        %p1416 = scmp.lt.s32.totalorder %s17, 1
        %s1417 = scalar_select %p1416, %s17, 1
        %s1418 = smul.addr %s1417, 4
        %s1419 = smul.addr %s1418, 8
        %s1420 = scalar_lea.vmem %s5, %s1419
      $region52: #{feature_enhance_forward.1} parent=47 // pred_fallthru
        _
    $region48: #{feature_enhance_forward.1} parent=5 // pred_fallthru
      _
  $region6: #{feature_enhance_forward.1} parent=0 // loop_footer
    %s15 = sadd.s32 1, %s11
  $region7: #{feature_enhance_forward.1} parent=0 // loop_footer_branch
    %10 = sbr.rel target = $region3
  $region8: #{feature_enhance_forward.1} parent=0 // loop_exit
    _

</llo_original>
